<compile_context>
chip_gen: v7x
topology: tpu7x:2x2x1
jax: 0.10.0
libtpu: 0.0.40
codegen_flags: <defaults>
</compile_context>

<pallas_src>
import jax
import jax.numpy as jnp
from jax.experimental import pallas as pl
from jax.experimental.pallas import tpu as pltpu

LANE = 128


def _round_up(n, m):
    return ((n + m - 1) // m) * m


def _choose_tile_m(B, max_tile=4096, target_steps=4, min_tile=256):
    """Pick the batch tile: big enough to amortize ~0.35us/step overhead, but keep
    >= target_steps grid steps when B allows (v7x megacore + pipeline liveness)."""
    if B <= min_tile:
        return _round_up(B, 8)          # x block stays f32 in VMEM: sublane = 8
    tm = _round_up(-(-B // target_steps), 16)
    return max(min_tile, min(max_tile, tm))


def mlp_kernel(x_ref, w1_ref, b1_ref, w2_ref, b2_ref, w3_ref, b3_ref, o_ref):
    # In-kernel cast of the streamed f32 x tile to bf16 (free on idle VPU slots).
    x = x_ref[...].astype(w1_ref.dtype)
    # hidden1 + relu1: bf16 operands -> f32 accumulate, f32 epilogue
    h1 = jnp.dot(x, w1_ref[...], preferred_element_type=jnp.float32)
    h1 = jnp.maximum(h1 + b1_ref[...], 0.0)
    # hidden2 + relu2
    h2 = jnp.dot(h1.astype(w2_ref.dtype), w2_ref[...],
                 preferred_element_type=jnp.float32)
    h2 = jnp.maximum(h2 + b2_ref[...], 0.0)
    # output layer (no activation); matmul is lane-padded to 128, but only the real
    # num_outputs columns are stored (narrow writeback — DMA bytes dominate here).
    out = jnp.dot(h2.astype(w3_ref.dtype), w3_ref[...],
                  preferred_element_type=jnp.float32)
    out = out + b3_ref[...]
    o_ref[...] = out[:, : o_ref.shape[-1]].astype(o_ref.dtype)


def prepare_params(w1, b1, w2, b2, w3, b3, compute_dtype=jnp.bfloat16):
    """Pad hidden/output widths to lane multiples and cast matmul operands to bf16.
    Call ONCE per weight set; padded rows/cols are zero so results (after the
    kernel's narrow store) match the unpadded network."""
    num_inputs, num_hiddens = w1.shape
    num_outputs = w3.shape[1]
    h_pad = _round_up(num_hiddens, LANE)
    o_pad = _round_up(num_outputs, LANE)

    w1p = jnp.zeros((num_inputs, h_pad), compute_dtype).at[:, :num_hiddens].set(
        w1.astype(compute_dtype))
    w2p = jnp.zeros((h_pad, h_pad), compute_dtype).at[:num_hiddens, :num_hiddens].set(
        w2.astype(compute_dtype))
    w3p = jnp.zeros((h_pad, o_pad), compute_dtype).at[:num_hiddens, :num_outputs].set(
        w3.astype(compute_dtype))
    b1p = jnp.zeros((1, h_pad), jnp.float32).at[:, :num_hiddens].set(b1)
    b2p = jnp.zeros((1, h_pad), jnp.float32).at[:, :num_hiddens].set(b2)
    b3p = jnp.zeros((1, o_pad), jnp.float32).at[:, :num_outputs].set(b3)

    return dict(w1=w1p, b1=b1p, w2=w2p, b2=b2p, w3=w3p, b3=b3p,
                num_inputs=num_inputs, num_outputs=num_outputs)


def classification_forward(x, params, *, max_tile=4096):
    """x: (B, num_inputs) f32; params from prepare_params(). Returns (B, num_outputs) f32."""
    B, num_inputs = x.shape
    assert num_inputs == params["num_inputs"]
    num_outputs = params["num_outputs"]
    w1p, b1p = params["w1"], params["b1"]
    w2p, b2p = params["w2"], params["b2"]
    w3p, b3p = params["w3"], params["b3"]
    h_pad = w1p.shape[1]
    o_pad = w3p.shape[1]

    tm = _choose_tile_m(B, max_tile=max_tile)
    grid = (pl.cdiv(B, tm),)  # ragged tail handled by Pallas (no cross-row reduction)

    def resident(shape):  # weights/biases stay in VMEM across all grid steps
        return pl.BlockSpec(shape, lambda i: (0, 0))

    out = pl.pallas_call(
        mlp_kernel,
        out_shape=jax.ShapeDtypeStruct((B, num_outputs), jnp.float32),
        grid=grid,
        in_specs=[
            pl.BlockSpec((tm, num_inputs), lambda i: (i, 0)),  # x: streamed f32 tiles
            resident((num_inputs, h_pad)),                     # w1
            resident((1, h_pad)),                              # b1
            resident((h_pad, h_pad)),                          # w2
            resident((1, h_pad)),                              # b2
            resident((h_pad, o_pad)),                          # w3
            resident((1, o_pad)),                              # b3
        ],
        out_specs=pl.BlockSpec((tm, num_outputs), lambda i: (i, 0)),  # narrow store
        compiler_params=pltpu.CompilerParams(
            dimension_semantics=("parallel",),
        ),
    )(x, w1p, b1p, w2p, b2p, w3p, b3p)

    return out


def init_linear_params(key, in_features, out_features):
    """Deterministic init mirroring torch.nn.Linear default (uniform +/- 1/sqrt(in)).
    Stored already transposed as (in_features, out_features): x @ W + b == torch's
    x @ weight.T + bias."""
    kw, kb = jax.random.split(key)
    bound = 1.0 / (in_features ** 0.5)
    w = jax.random.uniform(kw, (in_features, out_features), jnp.float32, -bound, bound)
    b = jax.random.uniform(kb, (1, out_features), jnp.float32, -bound, bound)
    return w, b


def _ref_f32(x, w1, b1, w2, b2, w3, b3):
    h = jnp.maximum(x @ w1 + b1, 0.0)
    h = jnp.maximum(h @ w2 + b2, 0.0)
    return h @ w3 + b3


def _ref_mixed(x, w1, b1, w2, b2, w3, b3, dtype=jnp.bfloat16):
    # replicates the kernel's precision recipe (bf16 matmul operands, f32 accum/epilogue)
    h = jnp.dot(x.astype(dtype), w1.astype(dtype), preferred_element_type=jnp.float32)
    h = jnp.maximum(h + b1, 0.0)
    h = jnp.dot(h.astype(dtype), w2.astype(dtype), preferred_element_type=jnp.float32)
    h = jnp.maximum(h + b2, 0.0)
    out = jnp.dot(h.astype(dtype), w3.astype(dtype), preferred_element_type=jnp.float32)
    return out + b3


if __name__ == "__main__":
    # small shapes consistent with the module's forward
    batch = 8
    num_inputs = 64
    num_hiddens = 32
    num_outputs = 10

    key = jax.random.PRNGKey(0)
    kx, k1, k2, k3 = jax.random.split(key, 4)

    x = jax.random.normal(kx, (batch, num_inputs), jnp.float32)
    w1, b1 = init_linear_params(k1, num_inputs, num_hiddens)
    w2, b2 = init_linear_params(k2, num_hiddens, num_hiddens)
    w3, b3 = init_linear_params(k3, num_hiddens, num_outputs)

    # pad/cast weights ONCE (cached per weight set), not per forward call
    params = prepare_params(w1, b1, w2, b2, w3, b3)

    out = classification_forward(x, params)
    out = jax.block_until_ready(out)
    assert out.shape == (batch, num_outputs)

    # tight check vs a JAX reference with the same mixed precision
    ref_mixed = _ref_mixed(x, w1, b1, w2, b2, w3, b3)
    assert jnp.allclose(out, ref_mixed, atol=1e-3, rtol=1e-3)
    # loose sanity check vs the pure-f32 reference (bf16 cast error only)
    # NOTE: bf16 matmul operands => ~1e-2 relative deviation from f32-exact logits.
    ref32 = _ref_f32(x, w1, b1, w2, b2, w3, b3)
    assert jnp.allclose(out, ref32, atol=5e-2, rtol=5e-2)

    # exercise the multi-step cdiv grid + ragged tail path (B not a tile multiple)
    big_B = 1000
    xb = jax.random.normal(jax.random.PRNGKey(1), (big_B, num_inputs), jnp.float32)
    out_big = classification_forward(xb, params)
    out_big = jax.block_until_ready(out_big)
    assert out_big.shape == (big_B, num_outputs)
    ref_big = _ref_mixed(xb, w1, b1, w2, b2, w3, b3)
    assert jnp.allclose(out_big, ref_big, atol=1e-3, rtol=1e-3)

    # NOTE: for tiny production batches (B~8), plain XLA fusion of the 3 GEMMs
    # will match or beat any Pallas kernel; this kernel pays off once B is large.
    print("KERNEL_OK")
</pallas_src>

<mosaic_0001>
module attributes {stable_mosaic.version = 11 : i64} {
  func.func @mlp_kernel(%arg0: i32, %arg1: memref<8x64xf32, #tpu.memory_space<vmem>>, %arg2: memref<64x128xbf16, #tpu.memory_space<vmem>>, %arg3: memref<1x128xf32, #tpu.memory_space<vmem>>, %arg4: memref<128x128xbf16, #tpu.memory_space<vmem>>, %arg5: memref<1x128xf32, #tpu.memory_space<vmem>>, %arg6: memref<128x128xbf16, #tpu.memory_space<vmem>>, %arg7: memref<1x128xf32, #tpu.memory_space<vmem>>, %arg8: memref<8x10xf32, #tpu.memory_space<vmem>>) attributes {dimension_semantics = [#tpu.dimension_semantics<parallel>], iteration_bounds = array<i64: 1>, scalar_prefetch = 0 : i64, scratch_operands = 0 : i64, tpu.core_type = #tpu.core_type<tc>, window_params = [{transform_indices = @transform_0, window_bounds = array<i64: 8, 64>}, {pipeline_mode = #tpu.pipeline_mode<synchronous>, transform_indices = @transform_1, window_bounds = array<i64: 64, 128>}, {pipeline_mode = #tpu.pipeline_mode<synchronous>, transform_indices = @transform_2, window_bounds = array<i64: 1, 128>}, {pipeline_mode = #tpu.pipeline_mode<synchronous>, transform_indices = @transform_3, window_bounds = array<i64: 128, 128>}, {pipeline_mode = #tpu.pipeline_mode<synchronous>, transform_indices = @transform_4, window_bounds = array<i64: 1, 128>}, {pipeline_mode = #tpu.pipeline_mode<synchronous>, transform_indices = @transform_5, window_bounds = array<i64: 128, 128>}, {pipeline_mode = #tpu.pipeline_mode<synchronous>, transform_indices = @transform_6, window_bounds = array<i64: 1, 128>}, {transform_indices = @transform_7, window_bounds = array<i64: 8, 10>}]} {
    %c0 = arith.constant 0 : index
    %c0_0 = arith.constant 0 : index
    %0 = vector.load %arg1[%c0, %c0_0] : memref<8x64xf32, #tpu.memory_space<vmem>>, vector<8x64xf32>
    %1 = arith.truncf %0 : vector<8x64xf32> to vector<8x64xbf16>
    %c0_1 = arith.constant 0 : index
    %c0_2 = arith.constant 0 : index
    %2 = vector.load %arg2[%c0_1, %c0_2] : memref<64x128xbf16, #tpu.memory_space<vmem>>, vector<64x128xbf16>
    %cst = arith.constant dense<0.000000e+00> : vector<8x128xf32>
    %3 = tpu.matmul %1, %2, %cst {dimension_numbers = #tpu.dot_dimension_numbers<[1], [0], [0], [1], [0, 0, 1, 1], [], []>} : vector<8x64xbf16>, vector<64x128xbf16>, vector<8x128xf32> -> vector<8x128xf32>
    %c0_3 = arith.constant 0 : index
    %c0_4 = arith.constant 0 : index
    %4 = vector.load %arg3[%c0_3, %c0_4] : memref<1x128xf32, #tpu.memory_space<vmem>>, vector<1x128xf32>
    %5 = vector.broadcast %4 : vector<1x128xf32> to vector<8x128xf32>
    %6 = arith.addf %3, %5 : vector<8x128xf32>
    %cst_5 = arith.constant 0.000000e+00 : f32
    %7 = vector.broadcast %cst_5 : f32 to vector<8x128xf32>
    %8 = arith.maximumf %6, %7 : vector<8x128xf32>
    %9 = arith.truncf %8 : vector<8x128xf32> to vector<8x128xbf16>
    %c0_6 = arith.constant 0 : index
    %c0_7 = arith.constant 0 : index
    %10 = vector.load %arg4[%c0_6, %c0_7] : memref<128x128xbf16, #tpu.memory_space<vmem>>, vector<128x128xbf16>
    %cst_8 = arith.constant dense<0.000000e+00> : vector<8x128xf32>
    %11 = tpu.matmul %9, %10, %cst_8 {dimension_numbers = #tpu.dot_dimension_numbers<[1], [0], [0], [1], [0, 0, 1, 1], [], []>} : vector<8x128xbf16>, vector<128x128xbf16>, vector<8x128xf32> -> vector<8x128xf32>
    %c0_9 = arith.constant 0 : index
    %c0_10 = arith.constant 0 : index
    %12 = vector.load %arg5[%c0_9, %c0_10] : memref<1x128xf32, #tpu.memory_space<vmem>>, vector<1x128xf32>
    %13 = vector.broadcast %12 : vector<1x128xf32> to vector<8x128xf32>
    %14 = arith.addf %11, %13 : vector<8x128xf32>
    %cst_11 = arith.constant 0.000000e+00 : f32
    %15 = vector.broadcast %cst_11 : f32 to vector<8x128xf32>
    %16 = arith.maximumf %14, %15 : vector<8x128xf32>
    %17 = arith.truncf %16 : vector<8x128xf32> to vector<8x128xbf16>
    %c0_12 = arith.constant 0 : index
    %c0_13 = arith.constant 0 : index
    %18 = vector.load %arg6[%c0_12, %c0_13] : memref<128x128xbf16, #tpu.memory_space<vmem>>, vector<128x128xbf16>
    %cst_14 = arith.constant dense<0.000000e+00> : vector<8x128xf32>
    %19 = tpu.matmul %17, %18, %cst_14 {dimension_numbers = #tpu.dot_dimension_numbers<[1], [0], [0], [1], [0, 0, 1, 1], [], []>} : vector<8x128xbf16>, vector<128x128xbf16>, vector<8x128xf32> -> vector<8x128xf32>
    %c0_15 = arith.constant 0 : index
    %c0_16 = arith.constant 0 : index
    %20 = vector.load %arg7[%c0_15, %c0_16] : memref<1x128xf32, #tpu.memory_space<vmem>>, vector<1x128xf32>
    %21 = vector.broadcast %20 : vector<1x128xf32> to vector<8x128xf32>
    %22 = arith.addf %19, %21 : vector<8x128xf32>
    %23 = vector.extract_strided_slice %22 {offsets = [0, 0], sizes = [8, 10], strides = [1, 1]} : vector<8x128xf32> to vector<8x10xf32>
    %c0_17 = arith.constant 0 : index
    %c0_18 = arith.constant 0 : index
    %24 = vector.load %arg8[%c0_17, %c0_18] : memref<8x10xf32, #tpu.memory_space<vmem>>, vector<8x10xf32>
    tpu.vector_store %arg8[%c0_17, %c0_18], %23 {strides = array<i32>} : memref<8x10xf32, #tpu.memory_space<vmem>>, vector<8x10xf32>,
    return
  }
  func.func @transform_0(%arg0: i32) -> (i32, i32) {
    %c0_i32 = arith.constant 0 : i32
    %c0_i32_0 = arith.constant 0 : i32
    return %arg0, %c0_i32 : i32, i32
  }
  func.func @transform_1(%arg0: i32) -> (i32, i32) {
    %c0_i32 = arith.constant 0 : i32
    %c0_i32_0 = arith.constant 0 : i32
    %c0_i32_1 = arith.constant 0 : i32
    return %c0_i32, %c0_i32_0 : i32, i32
  }
  func.func @transform_2(%arg0: i32) -> (i32, i32) {
    %c0_i32 = arith.constant 0 : i32
    %c0_i32_0 = arith.constant 0 : i32
    %c0_i32_1 = arith.constant 0 : i32
    return %c0_i32, %c0_i32_0 : i32, i32
  }
  func.func @transform_3(%arg0: i32) -> (i32, i32) {
    %c0_i32 = arith.constant 0 : i32
    %c0_i32_0 = arith.constant 0 : i32
    %c0_i32_1 = arith.constant 0 : i32
    return %c0_i32, %c0_i32_0 : i32, i32
  }
  func.func @transform_4(%arg0: i32) -> (i32, i32) {
    %c0_i32 = arith.constant 0 : i32
    %c0_i32_0 = arith.constant 0 : i32
    %c0_i32_1 = arith.constant 0 : i32
    return %c0_i32, %c0_i32_0 : i32, i32
  }
  func.func @transform_5(%arg0: i32) -> (i32, i32) {
    %c0_i32 = arith.constant 0 : i32
    %c0_i32_0 = arith.constant 0 : i32
    %c0_i32_1 = arith.constant 0 : i32
    return %c0_i32, %c0_i32_0 : i32, i32
  }
  func.func @transform_6(%arg0: i32) -> (i32, i32) {
    %c0_i32 = arith.constant 0 : i32
    %c0_i32_0 = arith.constant 0 : i32
    %c0_i32_1 = arith.constant 0 : i32
    return %c0_i32, %c0_i32_0 : i32, i32
  }
  func.func @transform_7(%arg0: i32) -> (i32, i32) {
    %c0_i32 = arith.constant 0 : i32
    %c0_i32_0 = arith.constant 0 : i32
    return %arg0, %c0_i32 : i32, i32
  }
}

</mosaic_0001>

<llo_original>
// kernel: tpu_custom_call.1
$region0: #{tpu_custom_call.1}
  #allocation0 [shape = 'u32[]', space=smem, size = 0x4, offset = 0x4, fixed_abs, tag = 'smem constant byte address 0x4 - core index']
  #allocation1 [shape = 'u32[144,128]{1,0:T(1,128)}', space=vmem, size = 0x12000, scoped, tag = 'internal scratch']
  %s0 = inlined_call_operand.hbm [shape: f32[8,64], index: 0, kind: input, shape index: {}]
  %s1 = inlined_call_operand.hbm [shape: bf16[64,128], index: 1, kind: input, shape index: {}]
  %s2 = inlined_call_operand.vmem [shape: f32[1,128], index: 2, kind: input, shape index: {}]
  %s3 = inlined_call_operand.hbm [shape: bf16[128,128], index: 3, kind: input, shape index: {}]
  %s4 = inlined_call_operand.vmem [shape: f32[1,128], index: 4, kind: input, shape index: {}]
  %s5 = inlined_call_operand.hbm [shape: bf16[128,128], index: 5, kind: input, shape index: {}]
  %s6 = inlined_call_operand.vmem [shape: f32[1,128], index: 6, kind: input, shape index: {}]
  %s7 = inlined_call_operand.hbm [shape: f32[8,10], index: 7, kind: output, shape index: {}]
  %s8 = sld [smem:[#allocation0]]
  $region54: #{tpu_custom_call.1} parent=0
    _
  %s10 = ssub.s32 1, %s8
  %s11 = scalar_select 0, %s10, %s8
  $region1: #{tpu_custom_call.1} parent=0
    #allocation2 [shape = 'u8[4096]{0}', space=vmem, size = 0x1000, scoped, tag = 'input window, operand 0, single buffered']
    #allocation3 [shape = 's32[1]{0}', space=sflag, size = 0x4, scoped, tag = 'scoped memory for tpu_custom_call.1']
    #allocation4 [shape = 's32[1]{0}', space=sflag, size = 0x4, scoped, tag = 'scoped memory for tpu_custom_call.1']
    #allocation5 [shape = 'u8[16384]{0}', space=vmem, size = 0x4000, scoped, tag = 'input window, operand 1, single buffered']
    #allocation6 [shape = 's32[1]{0}', space=sflag, size = 0x4, scoped, tag = 'scoped memory for tpu_custom_call.1']
    #allocation7 [shape = 'u8[32768]{0}', space=vmem, size = 0x8000, scoped, tag = 'input window, operand 3, single buffered']
    #allocation8 [shape = 'u8[32768]{0}', space=vmem, size = 0x8000, scoped, tag = 'input window, operand 5, single buffered']
    #allocation9 [shape = 's32[1]{0}', space=sflag, size = 0x4, scoped, tag = 'scoped memory for tpu_custom_call.1']
    #allocation10 [shape = 'u8[4096]{0}', space=vmem, size = 0x1000, scoped, tag = 'output window, operand 0, single buffered']
    %12 = vsyncpa [#allocation3], 0
    %13 = vsyncpa [#allocation6], 0
    %14 = vsyncpa [#allocation9], 0
    %15 = vsyncpa [#allocation4], 0
    // Predicated region
    $region2: #{tpu_custom_call.1} parent=1 // pred_check
      _
    $region3: #{tpu_custom_call.1} parent=1 // pred_check_branch
      %17 = sbr.rel (0) target = $region5
    $region4: #{tpu_custom_call.1} parent=1 // pred_region
      %s19 = ssub.s32 128, 128
      %20 = vsyncadd [#allocation3], %s19
      %s22 = sshll.u32 [#allocation2], 4
      %s23 = int_to_ptr.vmem [resolvable:$true] %s22
      %25 = dma.hbm_to_vmem [thread:$0]  %s0, 128, %s23, [#allocation3]
    $region5: #{tpu_custom_call.1} parent=1 // pred_fallthru
      _
    // Predicated region
    $region6: #{tpu_custom_call.1} parent=1 // pred_check
      _
    $region7: #{tpu_custom_call.1} parent=1 // pred_check_branch
      %27 = sbr.rel (0) target = $region9
    $region8: #{tpu_custom_call.1} parent=1 // pred_region
      %s29 = ssub.s32 512, 512
      %30 = vsyncadd [#allocation6], %s29
      %s31 = sshll.u32 [#allocation5], 4
      %s32 = int_to_ptr.vmem [resolvable:$true] %s31
      %37 = dma.hbm_to_vmem [thread:$0]  %s1, 512, %s32, [#allocation6], 64, 64, 4
    $region9: #{tpu_custom_call.1} parent=1 // pred_fallthru
      _
    // Predicated region
    $region10: #{tpu_custom_call.1} parent=1 // pred_check
      _
    $region11: #{tpu_custom_call.1} parent=1 // pred_check_branch
      %39 = sbr.rel (0) target = $region13
    $region12: #{tpu_custom_call.1} parent=1 // pred_region
      _
    $region13: #{tpu_custom_call.1} parent=1 // pred_fallthru
      _
    // Predicated region
    $region14: #{tpu_custom_call.1} parent=1 // pred_check
      _
    $region15: #{tpu_custom_call.1} parent=1 // pred_check_branch
      %41 = sbr.rel (0) target = $region17
    $region16: #{tpu_custom_call.1} parent=1 // pred_region
      %s43 = ssub.s32 1024, 1024
      %44 = vsyncadd [#allocation6], %s43
      %s45 = sshll.u32 [#allocation7], 4
      %s46 = int_to_ptr.vmem [resolvable:$true] %s45
      %51 = dma.hbm_to_vmem [thread:$0]  %s3, 1024, %s46, [#allocation6], 64, 64, 4
    $region17: #{tpu_custom_call.1} parent=1 // pred_fallthru
      _
    // Predicated region
    $region18: #{tpu_custom_call.1} parent=1 // pred_check
      _
    $region19: #{tpu_custom_call.1} parent=1 // pred_check_branch
      %53 = sbr.rel (0) target = $region21
    $region20: #{tpu_custom_call.1} parent=1 // pred_region
      _
    $region21: #{tpu_custom_call.1} parent=1 // pred_fallthru
      _
    // Predicated region
    $region22: #{tpu_custom_call.1} parent=1 // pred_check
      _
    $region23: #{tpu_custom_call.1} parent=1 // pred_check_branch
      %55 = sbr.rel (0) target = $region25
    $region24: #{tpu_custom_call.1} parent=1 // pred_region
      %s57 = ssub.s32 1024, 1024
      %58 = vsyncadd [#allocation9], %s57
      %s59 = sshll.u32 [#allocation8], 4
      %s60 = int_to_ptr.vmem [resolvable:$true] %s59
      %65 = dma.hbm_to_vmem [thread:$0]  %s5, 1024, %s60, [#allocation9], 64, 64, 4
    $region25: #{tpu_custom_call.1} parent=1 // pred_fallthru
      _
    // Predicated region
    $region26: #{tpu_custom_call.1} parent=1 // pred_check
      _
    $region27: #{tpu_custom_call.1} parent=1 // pred_check_branch
      %67 = sbr.rel (0) target = $region29
    $region28: #{tpu_custom_call.1} parent=1 // pred_region
      _
    $region29: #{tpu_custom_call.1} parent=1 // pred_fallthru
      _
    // Predicated region
    $region30: #{tpu_custom_call.1} parent=1 // pred_check
      _
    $region31: #{tpu_custom_call.1} parent=1 // pred_check_branch
      %69 = sbr.rel (0) target = $region33
    $region32: #{tpu_custom_call.1} parent=1 // pred_region
      %70 = dma.done [#allocation3], 128
    $region33: #{tpu_custom_call.1} parent=1 // pred_fallthru
      _
    // Predicated region
    $region34: #{tpu_custom_call.1} parent=1 // pred_check
      _
    $region35: #{tpu_custom_call.1} parent=1 // pred_check_branch
      %72 = sbr.rel (0) target = $region37
    $region36: #{tpu_custom_call.1} parent=1 // pred_region
      %73 = dma.done [#allocation6], 512
    $region37: #{tpu_custom_call.1} parent=1 // pred_fallthru
      _
    // Predicated region
    $region38: #{tpu_custom_call.1} parent=1 // pred_check
      _
    $region39: #{tpu_custom_call.1} parent=1 // pred_check_branch
      %75 = sbr.rel (0) target = $region41
    $region40: #{tpu_custom_call.1} parent=1 // pred_region
      %76 = dma.done [#allocation6], 1024
    $region41: #{tpu_custom_call.1} parent=1 // pred_fallthru
      _
    // Predicated region
    $region42: #{tpu_custom_call.1} parent=1 // pred_check
      _
    $region43: #{tpu_custom_call.1} parent=1 // pred_check_branch
      %78 = sbr.rel (0) target = $region45
    $region44: #{tpu_custom_call.1} parent=1 // pred_region
      %79 = dma.done [#allocation9], 1024
    $region45: #{tpu_custom_call.1} parent=1 // pred_fallthru
      _
    %v81 = vld [vmem:[#allocation2] sm:$0xff]
    %v82 = vpack.c.bf16 %v81, %v81
    %v83 = vld [vmem:[#allocation5] sm:$0xf]
    %v84 = vld [vmem:[#allocation5 + $0x4] sm:$0xf]
    %v85 = vld [vmem:[#allocation5 + $0x8] sm:$0xf]
    %v86 = vld [vmem:[#allocation5 + $0xc] sm:$0xf]
    %v87 = vld [vmem:[#allocation5 + $0x10] sm:$0xf]
    %v88 = vld [vmem:[#allocation5 + $0x14] sm:$0xf]
    %v89 = vld [vmem:[#allocation5 + $0x18] sm:$0xf]
    %v90 = vld [vmem:[#allocation5 + $0x1c] sm:$0xf]
    %v91 = vld [vmem:[%s2] sm:$0x1]
    %v93 = vlaneseq
    %v94 = vshrl.u32 %v93, 7
    %v95 = vsub.s32 0, %v94
    %v96 = vrot.slane %v91, %v95
    %v106 = vunpack.c.l.b16 %v83
    %v107 = vunpack.c.l.b16 %v84
    %v108 = vunpack.c.l.b16 %v85
    %v109 = vunpack.c.l.b16 %v86
    %v110 = vunpack.c.l.b16 %v87
    %v111 = vunpack.c.l.b16 %v88
    %v112 = vunpack.c.l.b16 %v89
    %v113 = vunpack.c.l.b16 %v90
    %v114 = vpack.c.b16 %v107, %v106
    %v115 = vpack.c.b16 %v109, %v108
    %v116 = vpack.c.b16 %v111, %v110
    %v117 = vpack.c.b16 %v113, %v112
    %vm122 = vcmask 523264
    %v124 = vsel %vm122, %v82, 0
    %126 = vmatprep.subr.bf16.mxu0 0
    %127 = vmatpush1.bf16.msra.mxu0 %v114
    %128 = vmatprep.subr.bf16.mxu0 0
    %129 = vmatpush1.bf16.msra.mxu0 %v115
    %130 = vmatprep.subr.bf16.mxu0 0
    %131 = vmatpush1.bf16.msra.mxu0 %v116
    %132 = vmatprep.subr.bf16.mxu0 0
    %133 = vmatpush1.bf16.msra.mxu0 %v117
    %134 = vmatprep.subr.bf16.mxu0 0
    %135 = vmatpush1.bf16.msra.mxu0 0
    %136 = vmatprep.subr.bf16.mxu0 0
    %137 = vmatpush1.bf16.msra.mxu0 0
    %138 = vmatprep.subr.bf16.mxu0 0
    %139 = vmatpush1.bf16.msra.mxu0 0
    %140 = vmatprep.subr.bf16.mxu0 0
    %141 = vmatpush1.bf16.msra.mxu0 0
    %142 = vmatprep.subr.bf16.mxu0 0
    %143 = vmatpush1.bf16.msra.mxu0 0
    %144 = vmatprep.subr.bf16.mxu0 0
    %145 = vmatpush1.bf16.msra.mxu0 0
    %146 = vmatprep.subr.bf16.mxu0 0
    %147 = vmatpush1.bf16.msra.mxu0 0
    %148 = vmatprep.subr.bf16.mxu0 0
    %149 = vmatpush1.bf16.msra.mxu0 0
    %150 = vmatprep.subr.bf16.mxu0 0
    %151 = vmatpush1.bf16.msra.mxu0 0
    %152 = vmatprep.subr.bf16.mxu0 0
    %153 = vmatpush1.bf16.msra.mxu0 0
    %154 = vmatprep.subr.bf16.mxu0 0
    %155 = vmatpush1.bf16.msra.mxu0 0
    %156 = vmatprep.subr.bf16.mxu0 0
    %157 = vmatpush1.bf16.msra.mxu0 0
    %158 = vmatprep.mubr.bf16.mxu0 0
    %159 = vmatmul.mubr.bf16.gmra.mrb[0].mxu0 %v124
    %v160 = vpop.f32.mrb[0].mxu0
    %v161 = vadd.f32 %v96, %v160
    %v162 = vpop.f32.mrb[0].mxu0
    %v163 = vpop.f32.mrb[0].mxu0
    %v164 = vpop.f32.mrb[0].mxu0
    %165 = vdwg.mxu0
    %v166 = vmax.f32 %v161, 0.0
    %v167 = vpack.c.bf16 %v166, %v166
    %v168 = vld [vmem:[#allocation7] sm:$0xf]
    %v169 = vld [vmem:[#allocation7 + $0x4] sm:$0xf]
    %v170 = vld [vmem:[#allocation7 + $0x8] sm:$0xf]
    %v171 = vld [vmem:[#allocation7 + $0xc] sm:$0xf]
    %v172 = vld [vmem:[#allocation7 + $0x10] sm:$0xf]
    %v173 = vld [vmem:[#allocation7 + $0x14] sm:$0xf]
    %v174 = vld [vmem:[#allocation7 + $0x18] sm:$0xf]
    %v175 = vld [vmem:[#allocation7 + $0x1c] sm:$0xf]
    %v176 = vld [vmem:[#allocation7 + $0x20] sm:$0xf]
    %v177 = vld [vmem:[#allocation7 + $0x24] sm:$0xf]
    %v178 = vld [vmem:[#allocation7 + $0x28] sm:$0xf]
    %v179 = vld [vmem:[#allocation7 + $0x2c] sm:$0xf]
    %v180 = vld [vmem:[#allocation7 + $0x30] sm:$0xf]
    %v181 = vld [vmem:[#allocation7 + $0x34] sm:$0xf]
    %v182 = vld [vmem:[#allocation7 + $0x38] sm:$0xf]
    %v183 = vld [vmem:[#allocation7 + $0x3c] sm:$0xf]
    %v184 = vld [vmem:[%s4] sm:$0x1]
    %v186 = vlaneseq
    %v187 = vshrl.u32 %v186, 7
    %v188 = vsub.s32 0, %v187
    %v189 = vrot.slane %v184, %v188
    %v207 = vunpack.c.l.b16 %v168
    %v208 = vunpack.c.l.b16 %v169
    %v209 = vunpack.c.l.b16 %v170
    %v210 = vunpack.c.l.b16 %v171
    %v211 = vunpack.c.l.b16 %v172
    %v212 = vunpack.c.l.b16 %v173
    %v213 = vunpack.c.l.b16 %v174
    %v214 = vunpack.c.l.b16 %v175
    %v215 = vunpack.c.l.b16 %v176
    %v216 = vunpack.c.l.b16 %v177
    %v217 = vunpack.c.l.b16 %v178
    %v218 = vunpack.c.l.b16 %v179
    %v219 = vunpack.c.l.b16 %v180
    %v220 = vunpack.c.l.b16 %v181
    %v221 = vunpack.c.l.b16 %v182
    %v222 = vunpack.c.l.b16 %v183
    %v223 = vpack.c.b16 %v208, %v207
    %v224 = vpack.c.b16 %v210, %v209
    %v225 = vpack.c.b16 %v212, %v211
    %v226 = vpack.c.b16 %v214, %v213
    %v227 = vpack.c.b16 %v216, %v215
    %v228 = vpack.c.b16 %v218, %v217
    %v229 = vpack.c.b16 %v220, %v219
    %v230 = vpack.c.b16 %v222, %v221
    %239 = vmatprep.subr.bf16.mxu0 0
    %240 = vmatpush1.bf16.msra.mxu0 %v223
    %241 = vmatprep.subr.bf16.mxu0 0
    %242 = vmatpush1.bf16.msra.mxu0 %v224
    %243 = vmatprep.subr.bf16.mxu0 0
    %244 = vmatpush1.bf16.msra.mxu0 %v225
    %245 = vmatprep.subr.bf16.mxu0 0
    %246 = vmatpush1.bf16.msra.mxu0 %v226
    %247 = vmatprep.subr.bf16.mxu0 0
    %248 = vmatpush1.bf16.msra.mxu0 %v227
    %249 = vmatprep.subr.bf16.mxu0 0
    %250 = vmatpush1.bf16.msra.mxu0 %v228
    %251 = vmatprep.subr.bf16.mxu0 0
    %252 = vmatpush1.bf16.msra.mxu0 %v229
    %253 = vmatprep.subr.bf16.mxu0 0
    %254 = vmatpush1.bf16.msra.mxu0 %v230
    %255 = vmatprep.subr.bf16.mxu0 0
    %256 = vmatpush1.bf16.msra.mxu0 0
    %257 = vmatprep.subr.bf16.mxu0 0
    %258 = vmatpush1.bf16.msra.mxu0 0
    %259 = vmatprep.subr.bf16.mxu0 0
    %260 = vmatpush1.bf16.msra.mxu0 0
    %261 = vmatprep.subr.bf16.mxu0 0
    %262 = vmatpush1.bf16.msra.mxu0 0
    %263 = vmatprep.subr.bf16.mxu0 0
    %264 = vmatpush1.bf16.msra.mxu0 0
    %265 = vmatprep.subr.bf16.mxu0 0
    %266 = vmatpush1.bf16.msra.mxu0 0
    %267 = vmatprep.subr.bf16.mxu0 0
    %268 = vmatpush1.bf16.msra.mxu0 0
    %269 = vmatprep.subr.bf16.mxu0 0
    %270 = vmatpush1.bf16.msra.mxu0 0
    %271 = vmatprep.mubr.bf16.mxu0 0
    %272 = vmatmul.mubr.bf16.gmra.mrb[0].mxu0 %v167
    %v273 = vpop.f32.mrb[0].mxu0
    %v274 = vadd.f32 %v189, %v273
    %v275 = vpop.f32.mrb[0].mxu0
    %v276 = vpop.f32.mrb[0].mxu0
    %v277 = vpop.f32.mrb[0].mxu0
    %278 = vdwg.mxu0
    %v279 = vmax.f32 %v274, 0.0
    %v280 = vpack.c.bf16 %v279, %v279
    %v281 = vld [vmem:[#allocation8] sm:$0xf]
    %v282 = vld [vmem:[#allocation8 + $0x4] sm:$0xf]
    %v283 = vld [vmem:[#allocation8 + $0x8] sm:$0xf]
    %v284 = vld [vmem:[#allocation8 + $0xc] sm:$0xf]
    %v285 = vld [vmem:[#allocation8 + $0x10] sm:$0xf]
    %v286 = vld [vmem:[#allocation8 + $0x14] sm:$0xf]
    %v287 = vld [vmem:[#allocation8 + $0x18] sm:$0xf]
    %v288 = vld [vmem:[#allocation8 + $0x1c] sm:$0xf]
    %v289 = vld [vmem:[#allocation8 + $0x20] sm:$0xf]
    %v290 = vld [vmem:[#allocation8 + $0x24] sm:$0xf]
    %v291 = vld [vmem:[#allocation8 + $0x28] sm:$0xf]
    %v292 = vld [vmem:[#allocation8 + $0x2c] sm:$0xf]
    %v293 = vld [vmem:[#allocation8 + $0x30] sm:$0xf]
    %v294 = vld [vmem:[#allocation8 + $0x34] sm:$0xf]
    %v295 = vld [vmem:[#allocation8 + $0x38] sm:$0xf]
    %v296 = vld [vmem:[#allocation8 + $0x3c] sm:$0xf]
    %v297 = vld [vmem:[%s6] sm:$0x1]
    %v299 = vlaneseq
    %v300 = vshrl.u32 %v299, 7
    %v301 = vsub.s32 0, %v300
    %v302 = vrot.slane %v297, %v301
    %v320 = vunpack.c.l.b16 %v281
    %v321 = vunpack.c.l.b16 %v282
    %v322 = vunpack.c.l.b16 %v283
    %v323 = vunpack.c.l.b16 %v284
    %v324 = vunpack.c.l.b16 %v285
    %v325 = vunpack.c.l.b16 %v286
    %v326 = vunpack.c.l.b16 %v287
    %v327 = vunpack.c.l.b16 %v288
    %v328 = vunpack.c.l.b16 %v289
    %v329 = vunpack.c.l.b16 %v290
    %v330 = vunpack.c.l.b16 %v291
    %v331 = vunpack.c.l.b16 %v292
    %v332 = vunpack.c.l.b16 %v293
    %v333 = vunpack.c.l.b16 %v294
    %v334 = vunpack.c.l.b16 %v295
    %v335 = vunpack.c.l.b16 %v296
    %v336 = vpack.c.b16 %v321, %v320
    %v337 = vpack.c.b16 %v323, %v322
    %v338 = vpack.c.b16 %v325, %v324
    %v339 = vpack.c.b16 %v327, %v326
    %v340 = vpack.c.b16 %v329, %v328
    %v341 = vpack.c.b16 %v331, %v330
    %v342 = vpack.c.b16 %v333, %v332
    %v343 = vpack.c.b16 %v335, %v334
    %352 = vmatprep.subr.bf16.mxu0 0
    %353 = vmatpush1.bf16.msra.mxu0 %v336
    %354 = vmatprep.subr.bf16.mxu0 0
    %355 = vmatpush1.bf16.msra.mxu0 %v337
    %356 = vmatprep.subr.bf16.mxu0 0
    %357 = vmatpush1.bf16.msra.mxu0 %v338
    %358 = vmatprep.subr.bf16.mxu0 0
    %359 = vmatpush1.bf16.msra.mxu0 %v339
    %360 = vmatprep.subr.bf16.mxu0 0
    %361 = vmatpush1.bf16.msra.mxu0 %v340
    %362 = vmatprep.subr.bf16.mxu0 0
    %363 = vmatpush1.bf16.msra.mxu0 %v341
    %364 = vmatprep.subr.bf16.mxu0 0
    %365 = vmatpush1.bf16.msra.mxu0 %v342
    %366 = vmatprep.subr.bf16.mxu0 0
    %367 = vmatpush1.bf16.msra.mxu0 %v343
    %368 = vmatprep.subr.bf16.mxu0 0
    %369 = vmatpush1.bf16.msra.mxu0 0
    %370 = vmatprep.subr.bf16.mxu0 0
    %371 = vmatpush1.bf16.msra.mxu0 0
    %372 = vmatprep.subr.bf16.mxu0 0
    %373 = vmatpush1.bf16.msra.mxu0 0
    %374 = vmatprep.subr.bf16.mxu0 0
    %375 = vmatpush1.bf16.msra.mxu0 0
    %376 = vmatprep.subr.bf16.mxu0 0
    %377 = vmatpush1.bf16.msra.mxu0 0
    %378 = vmatprep.subr.bf16.mxu0 0
    %379 = vmatpush1.bf16.msra.mxu0 0
    %380 = vmatprep.subr.bf16.mxu0 0
    %381 = vmatpush1.bf16.msra.mxu0 0
    %382 = vmatprep.subr.bf16.mxu0 0
    %383 = vmatpush1.bf16.msra.mxu0 0
    %384 = vmatprep.mubr.bf16.mxu0 0
    %385 = vmatmul.mubr.bf16.gmra.mrb[0].mxu0 %v280
    %v386 = vpop.f32.mrb[0].mxu0
    %v387 = vadd.f32 %v302, %v386
    %v388 = vpop.f32.mrb[0].mxu0
    %v389 = vpop.f32.mrb[0].mxu0
    %v390 = vpop.f32.mrb[0].mxu0
    %391 = vdwg.mxu0
    %vm392 = vcmask 80896
    %393 = vst.msk [vmem:[#allocation10] sm:$0xff] %vm392, %v387
    // Predicated region
    $region46: #{tpu_custom_call.1} parent=1 // pred_check
      _
    $region47: #{tpu_custom_call.1} parent=1 // pred_check_branch
      %395 = sbr.rel (0) target = $region49
    $region48: #{tpu_custom_call.1} parent=1 // pred_region
      %s397 = ssub.s32 128, 128
      %398 = vsyncadd [#allocation4], %s397
      %s400 = sshll.u32 [#allocation10], 4
      %s401 = int_to_ptr.vmem [resolvable:$true] %s400
      %403 = dma.vmem_to_hbm [thread:$0]  %s401, 128, %s7, [#allocation4]
    $region49: #{tpu_custom_call.1} parent=1 // pred_fallthru
      _
    // Predicated region
    $region50: #{tpu_custom_call.1} parent=1 // pred_check
      _
    $region51: #{tpu_custom_call.1} parent=1 // pred_check_branch
      %405 = sbr.rel (0) target = $region53
    $region52: #{tpu_custom_call.1} parent=1 // pred_region
      %406 = dma.done [#allocation4], 128
    $region53: #{tpu_custom_call.1} parent=1 // pred_fallthru
      _
    %407 = vsyncpa [#allocation3], 1
    %408 = vsyncpa [#allocation6], 1
    %409 = vsyncpa [#allocation9], 1
    %410 = vsyncpa [#allocation4], 1

</llo_original>
